<compile_context>
chip_gen: v7x
topology: tpu7x:2x2x1
jax: 0.10.0
libtpu: 0.0.40
codegen_flags: <defaults>
</compile_context>

<pallas_src>
import functools

import jax
import jax.numpy as jnp
from jax import lax
from jax.experimental import pallas as pl
from jax.experimental.pallas import tpu as pltpu

LANES = 128
SUBLANES = 8
MAX_BLOCK_ROWS = 8192                 # (8192, 128) f32 block = 4 MiB / input
VMEM_LIMIT_BYTES = 40 * 1024 * 1024   # 16 MiB double-buffer + headroom; safe on
                                      # v5e/v6e (128 MiB) and v7x (64 MiB) VMEM


def _tensorcores_per_device() -> int:
    """2 on v7x-style multi-TensorCore devices, else 1 (v5e/v6e)."""
    try:
        kind = jax.devices()[0].device_kind.lower()
    except Exception:
        return 1
    if "v7" in kind or "7x" in kind:
        return 2
    return 1


def _asym_l1_kernel(alpha, n_rows, block_rows, blocks_per_core, needs_mask,
                    num_cores, yp_ref, yt_ref, out_ref):
    if num_cores > 1:
        c = pl.program_id(0)      # core (CORE_PARALLEL) axis
        i = pl.program_id(1)      # streaming / reduction axis
    else:
        c = 0
        i = pl.program_id(0)

    # Zero this core's accumulator block at its first streaming step.
    @pl.when(i == 0)
    def _():
        out_ref[...] = jnp.zeros_like(out_ref)

    diff = yp_ref[...].astype(jnp.float32) - yt_ref[...].astype(jnp.float32)
    absd = jnp.abs(diff)
    loss = jnp.where(diff < 0, alpha * absd, absd)

    def _accum(x):
        # VPU-only partial reduction into the vreg-shaped (8,128) accumulator
        # (block_rows is always a multiple of 8 by construction).
        out_ref[0] += x.reshape(block_rows // SUBLANES, SUBLANES, LANES).sum(axis=0)

    if needs_mask:
        # Only the block(s) whose logical row range extends past n_rows (the
        # ragged tail block, or a clamped duplicate block from an uneven core
        # split) pay for the iota/compare/select; interior blocks stay cheap.
        logical_block = c * blocks_per_core + i
        is_edge = (logical_block + 1) * block_rows > n_rows

        @pl.when(jnp.logical_not(is_edge))
        def _():
            _accum(loss)

        @pl.when(is_edge)
        def _():
            row0 = logical_block * block_rows
            rows = lax.broadcasted_iota(jnp.int32, (block_rows, LANES), 0) + row0
            _accum(jnp.where(rows < n_rows, loss, 0.0))
    else:
        _accum(loss)


def asymmetric_l1(y_pred, y_true, alpha: float):
    assert y_pred.shape == y_true.shape
    n_elems = y_pred.size

    flat_p = y_pred.reshape(-1)
    flat_t = y_true.reshape(-1)

    # Sub-lane (<128 element) remainder handled with plain XLA instead of a
    # full-array jnp.pad copy through HBM.
    rem = n_elems % LANES
    n_main = n_elems - rem
    tail_sum = jnp.float32(0.0)
    if rem:
        tp = flat_p[n_main:].astype(jnp.float32)
        tt = flat_t[n_main:].astype(jnp.float32)
        td = tp - tt
        ta = jnp.abs(td)
        tail_sum = jnp.sum(jnp.where(td < 0, alpha * ta, ta))

    n_rows = n_main // LANES
    if n_rows < SUBLANES:
        # Smaller than one (8,128) vreg tile: plain XLA is already optimal and
        # avoids sub-tile layout corner cases.
        mp = flat_p[:n_main].astype(jnp.float32)
        mt = flat_t[:n_main].astype(jnp.float32)
        md = mp - mt
        ma = jnp.abs(md)
        main_sum = jnp.sum(jnp.where(md < 0, alpha * ma, ma))
        return (main_sum + tail_sum) / n_elems

    p2d = flat_p[:n_main].reshape(n_rows, LANES)
    t2d = flat_t[:n_main].reshape(n_rows, LANES)

    # block_rows is always a multiple of 8 (8192 is also a multiple of 16, so
    # packed bf16 layouts stay aligned on the big-block path); any ragged tail
    # becomes a Pallas boundary block, masked in-kernel on that step only.
    if n_rows <= MAX_BLOCK_ROWS:
        block_rows = (n_rows // SUBLANES) * SUBLANES
    else:
        block_rows = MAX_BLOCK_ROWS
    n_blocks = pl.cdiv(n_rows, block_rows)

    num_cores = _tensorcores_per_device()
    if n_blocks < num_cores:
        num_cores = 1                      # not enough blocks to split
    blocks_per_core = pl.cdiv(n_blocks, num_cores)
    # Mask only when logical coverage exceeds the real rows (ragged tail block
    # or one clamped duplicate block from an odd 2-way split).
    needs_mask = (num_cores * blocks_per_core * block_rows) != n_rows

    if num_cores > 1:
        grid = (num_cores, blocks_per_core)

        def in_map(c, i):
            # Clamp so an odd split's trailing iteration stays in bounds; its
            # contribution is masked to zero in-kernel. Costs at most one
            # extra block of HBM traffic per call.
            return (jnp.minimum(c * blocks_per_core + i, n_blocks - 1), 0)

        out_map = lambda c, i: (c, 0, 0)
        dim_sem = (pltpu.CORE_PARALLEL, pltpu.ARBITRARY)
    else:
        grid = (blocks_per_core,)
        in_map = lambda i: (i, 0)
        out_map = lambda i: (0, 0, 0)
        dim_sem = (pltpu.ARBITRARY,)

    itemsize = p2d.dtype.itemsize
    cost = pl.CostEstimate(
        flops=5 * n_main,
        transcendentals=0,
        bytes_accessed=2 * n_main * itemsize + num_cores * SUBLANES * LANES * 4,
    )

    partials = pl.pallas_call(
        functools.partial(_asym_l1_kernel, alpha, n_rows, block_rows,
                          blocks_per_core, needs_mask, num_cores),
        out_shape=jax.ShapeDtypeStruct((num_cores, SUBLANES, LANES),
                                       jnp.float32),
        grid_spec=pltpu.PrefetchScalarGridSpec(
            num_scalar_prefetch=0,
            grid=grid,
            in_specs=[
                pl.BlockSpec((block_rows, LANES), in_map),
                pl.BlockSpec((block_rows, LANES), in_map),
            ],
            out_specs=pl.BlockSpec((1, SUBLANES, LANES), out_map),
        ),
        compiler_params=pltpu.CompilerParams(
            dimension_semantics=dim_sem,
            vmem_limit_bytes=VMEM_LIMIT_BYTES,
        ),
        cost_estimate=cost,
    )(p2d, t2d)

    # Tiny final cross-lane reduce (num_cores*8*128 floats) done by XLA.
    return (jnp.sum(partials) + tail_sum) / n_elems


def asymmetric_l1_ref(y_pred, y_true, alpha: float):
    diff = y_pred.astype(jnp.float32) - y_true.astype(jnp.float32)
    loss = jnp.where(diff < 0, alpha * jnp.abs(diff), jnp.abs(diff))
    return jnp.mean(loss)


if __name__ == "__main__":
    key = jax.random.PRNGKey(0)
    k1, k2, k3, k4, k5, k6, k7, k8 = jax.random.split(key, 8)
    alpha = 2.5

    # Primary case: NCHW (B=2, C=4, H=16, W=16), as in the PyTorch module.
    y_pred = jax.random.normal(k1, (2, 4, 16, 16), dtype=jnp.float32)
    y_true = jax.random.normal(k2, (2, 4, 16, 16), dtype=jnp.float32)
    out = jax.block_until_ready(asymmetric_l1(y_pred, y_true, alpha))
    ref = asymmetric_l1_ref(y_pred, y_true, alpha)
    assert jnp.allclose(out, ref, rtol=1e-5, atol=1e-6), (out, ref)

    # Unaligned + bf16 case (XLA sub-128 tail + ragged boundary block).
    yp_b = jax.random.normal(k3, (3, 5, 7, 11), dtype=jnp.bfloat16)
    yt_b = jax.random.normal(k4, (3, 5, 7, 11), dtype=jnp.bfloat16)
    out_b = jax.block_until_ready(asymmetric_l1(yp_b, yt_b, alpha))
    ref_b = asymmetric_l1_ref(yp_b, yt_b, alpha)
    assert jnp.allclose(out_b, ref_b, rtol=1e-3, atol=1e-3), (out_b, ref_b)

    # Multi-block streaming case (4 aligned 8192-row blocks, no masking).
    yp_l = jax.random.normal(k5, (2, 8, 512, 512), dtype=jnp.float32)
    yt_l = jax.random.normal(k6, (2, 8, 512, 512), dtype=jnp.float32)
    out_l = jax.block_until_ready(asymmetric_l1(yp_l, yt_l, alpha))
    ref_l = asymmetric_l1_ref(yp_l, yt_l, alpha)
    assert jnp.allclose(out_l, ref_l, rtol=1e-4, atol=1e-5), (out_l, ref_l)

    # Ragged multi-block case (exercises the pl.when-gated edge mask).
    yp_r = jax.random.normal(k7, (1, 3, 700, 512), dtype=jnp.float32)
    yt_r = jax.random.normal(k8, (1, 3, 700, 512), dtype=jnp.float32)
    out_r = jax.block_until_ready(asymmetric_l1(yp_r, yt_r, alpha))
    ref_r = asymmetric_l1_ref(yp_r, yt_r, alpha)
    assert jnp.allclose(out_r, ref_r, rtol=1e-4, atol=1e-5), (out_r, ref_r)

    print("KERNEL_OK")
</pallas_src>

<mosaic_0001>
module attributes {stable_mosaic.version = 11 : i64} {
  func.func @_asym_l1_kernel(%arg0: i32, %arg1: memref<16x128xf32, #tpu.memory_space<vmem>>, %arg2: memref<16x128xf32, #tpu.memory_space<vmem>>, %arg3: memref<1x8x128xf32, #tpu.memory_space<vmem>>) attributes {dimension_semantics = [#tpu.dimension_semantics<arbitrary>], iteration_bounds = array<i64: 1>, scalar_prefetch = 0 : i64, scratch_operands = 0 : i64, tpu.core_type = #tpu.core_type<tc>, window_params = [{transform_indices = @transform_0, window_bounds = array<i64: 16, 128>}, {transform_indices = @transform_1, window_bounds = array<i64: 16, 128>}, {pipeline_mode = #tpu.pipeline_mode<synchronous>, transform_indices = @transform_2, window_bounds = array<i64: 1, 8, 128>}]} {
    %c0_i32 = arith.constant 0 : i32
    %0 = arith.cmpi eq, %arg0, %c0_i32 : i32
    %1 = arith.extui %0 : i1 to i32
    %c0_i32_0 = arith.constant 0 : i32
    %2 = arith.cmpi ne, %1, %c0_i32_0 : i32
    scf.if %2 {
      %cst_12 = arith.constant 0.000000e+00 : f32
      %20 = vector.broadcast %cst_12 : f32 to vector<1x8x128xf32>
      %c0_13 = arith.constant 0 : index
      %c0_14 = arith.constant 0 : index
      %c0_15 = arith.constant 0 : index
      %21 = vector.load %arg3[%c0_13, %c0_14, %c0_15] : memref<1x8x128xf32, #tpu.memory_space<vmem>>, vector<1x8x128xf32>
      tpu.vector_store %arg3[%c0_13, %c0_14, %c0_15], %20 {strides = array<i32>} : memref<1x8x128xf32, #tpu.memory_space<vmem>>, vector<1x8x128xf32>,
    } else {
    }
    %c0 = arith.constant 0 : index
    %c0_1 = arith.constant 0 : index
    %3 = vector.load %arg1[%c0, %c0_1] : memref<16x128xf32, #tpu.memory_space<vmem>>, vector<16x128xf32>
    %c0_2 = arith.constant 0 : index
    %c0_3 = arith.constant 0 : index
    %4 = vector.load %arg2[%c0_2, %c0_3] : memref<16x128xf32, #tpu.memory_space<vmem>>, vector<16x128xf32>
    %5 = arith.subf %3, %4 : vector<16x128xf32>
    %6 = math.absf %5 : vector<16x128xf32>
    %cst = arith.constant 0.000000e+00 : f32
    %7 = vector.broadcast %cst : f32 to vector<16x128xf32>
    %8 = arith.cmpf olt, %5, %7 : vector<16x128xf32>
    %cst_4 = arith.constant 2.500000e+00 : f32
    %9 = vector.broadcast %cst_4 : f32 to vector<16x128xf32>
    %10 = arith.mulf %9, %6 : vector<16x128xf32>
    %11 = arith.select %8, %10, %6 : vector<16x128xi1>, vector<16x128xf32>
    %c0_5 = arith.constant 0 : index
    %c0_6 = arith.constant 0 : index
    %c0_7 = arith.constant 0 : index
    %12 = vector.load %arg3[%c0_5, %c0_6, %c0_7] : memref<1x8x128xf32, #tpu.memory_space<vmem>>, vector<1x8x128xf32>
    %13 = vector.shape_cast %12 : vector<1x8x128xf32> to vector<8x128xf32>
    %14 = vector.shape_cast %11 : vector<16x128xf32> to vector<2x8x128xf32>
    %cst_8 = arith.constant dense<0.000000e+00> : vector<8x128xf32>
    %15 = vector.multi_reduction <add>, %14, %cst_8 [0] : vector<2x8x128xf32> to vector<8x128xf32>
    %16 = arith.addf %13, %15 : vector<8x128xf32>
    %c0_9 = arith.constant 0 : index
    %c0_10 = arith.constant 0 : index
    %c0_11 = arith.constant 0 : index
    %17 = vector.load %arg3[%c0_9, %c0_10, %c0_11] : memref<1x8x128xf32, #tpu.memory_space<vmem>>, vector<1x8x128xf32>
    %18 = vector.shape_cast %17 : vector<1x8x128xf32> to vector<8x128xf32>
    %19 = vector.shape_cast %16 : vector<8x128xf32> to vector<1x8x128xf32>
    tpu.vector_store %arg3[%c0_9, %c0_10, %c0_11], %19 {strides = array<i32>} : memref<1x8x128xf32, #tpu.memory_space<vmem>>, vector<1x8x128xf32>,
    return
  }
  func.func @transform_0(%arg0: i32) -> (i32, i32) {
    %c0_i32 = arith.constant 0 : i32
    %c0_i32_0 = arith.constant 0 : i32
    return %arg0, %c0_i32 : i32, i32
  }
  func.func @transform_1(%arg0: i32) -> (i32, i32) {
    %c0_i32 = arith.constant 0 : i32
    %c0_i32_0 = arith.constant 0 : i32
    return %arg0, %c0_i32 : i32, i32
  }
  func.func @transform_2(%arg0: i32) -> (i32, i32, i32) {
    %c0_i32 = arith.constant 0 : i32
    %c0_i32_0 = arith.constant 0 : i32
    %c0_i32_1 = arith.constant 0 : i32
    %c0_i32_2 = arith.constant 0 : i32
    return %c0_i32, %c0_i32_0, %c0_i32_1 : i32, i32, i32
  }
}

</mosaic_0001>

<llo_original>
// kernel: tpu_custom_call.1
$region0: #{tpu_custom_call.1}
  #allocation0 [shape = 'u32[]', space=smem, size = 0x4, offset = 0x4, fixed_abs, tag = 'smem constant byte address 0x4 - core index']
  #allocation1 [shape = 'u32[144,128]{1,0:T(1,128)}', space=vmem, size = 0x12000, scoped, tag = 'internal scratch']
  %s0 = inlined_call_operand.hbm [shape: f32[16,128], index: 0, kind: input, shape index: {}]
  %s1 = inlined_call_operand.hbm [shape: f32[16,128], index: 1, kind: input, shape index: {}]
  %s2 = inlined_call_operand.hbm [shape: f32[1,8,128], index: 2, kind: output, shape index: {}]
  %s3 = sld [smem:[#allocation0]]
  $region30: #{tpu_custom_call.1} parent=0
    _
  %s5 = ssub.s32 1, %s3
  %s6 = scalar_select 0, %s5, %s3
  $region1: #{tpu_custom_call.1} parent=0
    #allocation2 [shape = 'u8[8192]{0}', space=vmem, size = 0x2000, scoped, tag = 'input window, operand 0, single buffered']
    #allocation3 [shape = 's32[1]{0}', space=sflag, size = 0x4, scoped, tag = 'scoped memory for tpu_custom_call.1']
    #allocation4 [shape = 's32[1]{0}', space=sflag, size = 0x4, scoped, tag = 'scoped memory for tpu_custom_call.1']
    #allocation5 [shape = 'u8[8192]{0}', space=vmem, size = 0x2000, scoped, tag = 'input window, operand 1, single buffered']
    #allocation6 [shape = 's32[1]{0}', space=sflag, size = 0x4, scoped, tag = 'scoped memory for tpu_custom_call.1']
    #allocation7 [shape = 'u8[4096]{0}', space=vmem, size = 0x1000, scoped, tag = 'output window, operand 0, single buffered']
    %7 = vsyncpa [#allocation3], 0
    %8 = vsyncpa [#allocation6], 0
    %9 = vsyncpa [#allocation4], 0
    // Predicated region
    $region2: #{tpu_custom_call.1} parent=1 // pred_check
      _
    $region3: #{tpu_custom_call.1} parent=1 // pred_check_branch
      %11 = sbr.rel (0) target = $region5
    $region4: #{tpu_custom_call.1} parent=1 // pred_region
      %s13 = ssub.s32 256, 256
      %14 = vsyncadd [#allocation3], %s13
      %s15 = sshll.u32 [#allocation2], 4
      %s16 = int_to_ptr.vmem [resolvable:$true] %s15
      %21 = dma.hbm_to_vmem [thread:$0]  %s0, 256, %s16, [#allocation3], 128, 128, 8
    $region5: #{tpu_custom_call.1} parent=1 // pred_fallthru
      _
    // Predicated region
    $region6: #{tpu_custom_call.1} parent=1 // pred_check
      _
    $region7: #{tpu_custom_call.1} parent=1 // pred_check_branch
      %23 = sbr.rel (0) target = $region9
    $region8: #{tpu_custom_call.1} parent=1 // pred_region
      %s25 = ssub.s32 256, 256
      %26 = vsyncadd [#allocation6], %s25
      %s27 = sshll.u32 [#allocation5], 4
      %s28 = int_to_ptr.vmem [resolvable:$true] %s27
      %33 = dma.hbm_to_vmem [thread:$0]  %s1, 256, %s28, [#allocation6], 128, 128, 8
    $region9: #{tpu_custom_call.1} parent=1 // pred_fallthru
      _
    // Predicated region
    $region10: #{tpu_custom_call.1} parent=1 // pred_check
      _
    $region11: #{tpu_custom_call.1} parent=1 // pred_check_branch
      %35 = sbr.rel (0) target = $region13
    $region12: #{tpu_custom_call.1} parent=1 // pred_region
      %36 = dma.done [#allocation3], 256
    $region13: #{tpu_custom_call.1} parent=1 // pred_fallthru
      _
    // Predicated region
    $region14: #{tpu_custom_call.1} parent=1 // pred_check
      _
    $region15: #{tpu_custom_call.1} parent=1 // pred_check_branch
      %38 = sbr.rel (0) target = $region17
    $region16: #{tpu_custom_call.1} parent=1 // pred_region
      %39 = dma.done [#allocation6], 256
    $region17: #{tpu_custom_call.1} parent=1 // pred_fallthru
      _
    %p40 = scmp.eq.s32.totalorder 0, 0
    // Predicated region
    $region18: #{tpu_custom_call.1} parent=1 // pred_check
      %p41 = pneg %p40
    $region19: #{tpu_custom_call.1} parent=1 // pred_check_branch
      %43 = sbr.rel (%p41) target = $region21
    $region20: #{tpu_custom_call.1} parent=1 // pred_region
      %44 = vst [vmem:[#allocation7] sm:$0xff] 0.0
    $region21: #{tpu_custom_call.1} parent=1 // pred_fallthru
      _
    %v45 = vld [vmem:[#allocation2] sm:$0xff]
    %v46 = vld [vmem:[#allocation2 + $0x8] sm:$0xff]
    %v47 = vld [vmem:[#allocation5] sm:$0xff]
    %v48 = vld [vmem:[#allocation5 + $0x8] sm:$0xff]
    %v49 = vsub.f32 %v45, %v47
    %v50 = vsub.f32 %v46, %v48
    %v51 = vand.u32 2147483647, %v49
    %v52 = vand.u32 2147483647, %v50
    %vm53 = vcmp.lt.f32.partialorder %v49, 0.0
    %vm54 = vcmp.lt.f32.partialorder %v50, 0.0
    %v55 = vmul.f32 %v51, 2.5
    %v56 = vmul.f32 %v52, 2.5
    %v57 = vsel %vm53, %v55, %v51
    %v58 = vsel %vm54, %v56, %v52
    %v59 = vld [vmem:[#allocation7] sm:$0xff]
    %v60 = vadd.f32 %v57, %v58
    %v61 = vadd.f32 %v59, %v60
    %62 = vst [vmem:[#allocation7] sm:$0xff] %v61
    // Predicated region
    $region22: #{tpu_custom_call.1} parent=1 // pred_check
      _
    $region23: #{tpu_custom_call.1} parent=1 // pred_check_branch
      %64 = sbr.rel (0) target = $region25
    $region24: #{tpu_custom_call.1} parent=1 // pred_region
      %s66 = ssub.s32 128, 128
      %67 = vsyncadd [#allocation4], %s66
      %s69 = sshll.u32 [#allocation7], 4
      %s70 = int_to_ptr.vmem [resolvable:$true] %s69
      %72 = dma.vmem_to_hbm [thread:$0]  %s70, 128, %s2, [#allocation4]
    $region25: #{tpu_custom_call.1} parent=1 // pred_fallthru
      _
    // Predicated region
    $region26: #{tpu_custom_call.1} parent=1 // pred_check
      _
    $region27: #{tpu_custom_call.1} parent=1 // pred_check_branch
      %74 = sbr.rel (0) target = $region29
    $region28: #{tpu_custom_call.1} parent=1 // pred_region
      %75 = dma.done [#allocation4], 128
    $region29: #{tpu_custom_call.1} parent=1 // pred_fallthru
      _
    %76 = vsyncpa [#allocation3], 1
    %77 = vsyncpa [#allocation6], 1
    %78 = vsyncpa [#allocation4], 1

</llo_original>
